<compile_context>
chip_gen: v7x
topology: tpu7x:2x2x1
jax: 0.10.0
libtpu: 0.0.40
codegen_flags: <defaults>
</compile_context>

<pallas_src>
import jax
import jax.numpy as jnp
from jax.experimental import pallas as pl
from jax.experimental.pallas import tpu as pltpu


def _copy_kernel(x_ref, o_ref):
    # x_ref: (cpg_tile, s0_tile, S1) slab of input group g.
    # o_ref: same-shaped slab at group-position g of the shuffled output.
    # The permutation lives entirely in the BlockSpec index maps.
    o_ref[...] = x_ref[...]


def _largest_divisor(n, limit, multiple_of=1):
    """Largest d with d | n, d <= limit and d % multiple_of == 0 (or None)."""
    for d in range(min(n, limit), 0, -1):
        if n % d == 0 and d % multiple_of == 0:
            return d
    return None


def channel_shuffle(x: jax.Array, groups: int,
                    *, vmem_block_budget_bytes: int = 4 * 1024 * 1024) -> jax.Array:
    """Pallas TPU implementation of ChannelShuffle.forward (NCHW)."""
    B, C, H, W = x.shape
    assert C % groups == 0, "num_channels must be divisible by groups"
    cpg = C // groups

    # Identity permutation — skip the copy entirely.
    if groups == 1 or cpg == 1:
        return x

    HW = H * W
    itemsize = jnp.dtype(x.dtype).itemsize

    # Lane-dense spatial layout when possible (last dim = 128 lanes, unmasked
    # stores).  Fallback keeps (H, W); in both cases the last two block dims
    # equal the full array dims, so the (8,128) constraint is satisfied.
    if HW % 128 == 0:
        S0, S1 = HW // 128, 128
    else:
        S0, S1 = H, W

    # --- Pick block sizes so double-buffered in+out tiles fit VMEM. ---------
    # Tile the channels-per-group axis first (third-from-last: no layout
    # constraint on its tile size).
    row_bytes = S1 * itemsize
    chan_bytes = S0 * row_bytes
    cpg_tile = _largest_divisor(
        cpg, max(1, vmem_block_budget_bytes // max(chan_bytes, 1))) or 1

    # If even a single channel slab exceeds the budget, also tile the spatial
    # sublane axis (tile must be a multiple of the dtype's sublane pack so the
    # (8,128)-style tiling constraint stays satisfied).
    s0_tile = S0
    if cpg_tile == 1 and chan_bytes > vmem_block_budget_bytes:
        pack = 8 * max(1, 4 // itemsize)        # 8 (f32) / 16 (bf16) / 32 (i8)
        cand = _largest_divisor(
            S0, max(1, vmem_block_budget_bytes // max(row_bytes, 1)),
            multiple_of=pack)
        if cand is not None:
            s0_tile = cand

    # Free (row-major) reshape: x5[b, g, i, s0, s1] == x[b, g*cpg + i, ...].
    x5 = x.reshape(B, groups, cpg, S0, S1)

    grid = (B, groups, cpg // cpg_tile, S0 // s0_tile)

    out5 = pl.pallas_call(
        _copy_kernel,
        out_shape=jax.ShapeDtypeStruct((B, cpg, groups, S0, S1), x.dtype),
        grid=grid,
        in_specs=[
            # Read a (cpg_tile, s0_tile, S1) slab of group g: contiguous in HBM.
            pl.BlockSpec(
                (None, None, cpg_tile, s0_tile, S1),
                lambda b, g, c, s: (b, g, c, s, 0),
            ),
        ],
        # Write it at group-position g of the transposed channel layout:
        # out5[b, c-tile, g, s-tile, :] = x5[b, g, c-tile, s-tile, :].
        out_specs=pl.BlockSpec(
            (None, cpg_tile, None, s0_tile, S1),
            lambda b, g, c, s: (b, c, g, s, 0),
        ),
        compiler_params=pltpu.CompilerParams(
            dimension_semantics=("parallel", "parallel", "parallel", "parallel"),
        ),
    )(x5)

    # Row-major flatten of (cpg, groups) -> channel i*groups + g: exactly the
    # PyTorch view/transpose/contiguous/view semantics.
    return out5.reshape(B, C, H, W)


def _ref_shuffle(x: jax.Array, groups: int) -> jax.Array:
    """Pure-JAX reference mirroring the PyTorch module."""
    B, C, H, W = x.shape
    return (
        x.reshape(B, groups, C // groups, H, W)
        .transpose(0, 2, 1, 3, 4)
        .reshape(B, C, H, W)
    )


if __name__ == "__main__":
    key = jax.random.PRNGKey(0)

    # Main case: lane-dense path (H*W % 128 == 0), f32.
    B, C, H, W, groups = 2, 4, 16, 16, 2
    x = jax.random.normal(key, (B, C, H, W), dtype=jnp.float32)
    out = jax.block_until_ready(channel_shuffle(x, groups))
    assert out.shape == (B, C, H, W) and out.dtype == x.dtype
    assert jnp.array_equal(out, _ref_shuffle(x, groups)), "f32 shuffle mismatch"

    # Fallback case: H*W not divisible by 128, packed dtype (bf16), groups=3.
    key2 = jax.random.PRNGKey(1)
    B2, C2, H2, W2, groups2 = 2, 6, 8, 8, 3
    x2 = jax.random.normal(key2, (B2, C2, H2, W2), dtype=jnp.bfloat16)
    out2 = jax.block_until_ready(channel_shuffle(x2, groups2))
    assert out2.shape == (B2, C2, H2, W2) and out2.dtype == x2.dtype
    assert jnp.array_equal(out2, _ref_shuffle(x2, groups2)), "bf16 shuffle mismatch"

    # Identity case (groups == 1) — short-circuited, no kernel launch.
    out3 = jax.block_until_ready(channel_shuffle(x, 1))
    assert jnp.array_equal(out3, x)

    print("KERNEL_OK")
</pallas_src>

<mosaic_0001>
module attributes {stable_mosaic.version = 11 : i64} {
  func.func @_copy_kernel(%arg0: i32, %arg1: i32, %arg2: i32, %arg3: i32, %arg4: memref<1x1x2x2x128xf32, #tpu.memory_space<vmem>>, %arg5: memref<1x2x1x2x128xf32, #tpu.memory_space<vmem>>) attributes {dimension_semantics = [#tpu.dimension_semantics<parallel>, #tpu.dimension_semantics<parallel>, #tpu.dimension_semantics<parallel>, #tpu.dimension_semantics<parallel>], iteration_bounds = array<i64: 2, 2, 1, 1>, scalar_prefetch = 0 : i64, scratch_operands = 0 : i64, tpu.core_type = #tpu.core_type<tc>, window_params = [{transform_indices = @transform_0, window_bounds = array<i64: 1, 1, 2, 2, 128>}, {transform_indices = @transform_1, window_bounds = array<i64: 1, 2, 1, 2, 128>}]} {
    %c0 = arith.constant 0 : index
    %c0_0 = arith.constant 0 : index
    %c0_1 = arith.constant 0 : index
    %c0_2 = arith.constant 0 : index
    %c0_3 = arith.constant 0 : index
    %0 = vector.load %arg4[%c0, %c0_0, %c0_1, %c0_2, %c0_3] : memref<1x1x2x2x128xf32, #tpu.memory_space<vmem>>, vector<1x1x2x2x128xf32>
    %1 = vector.shape_cast %0 : vector<1x1x2x2x128xf32> to vector<2x2x128xf32>
    %c0_4 = arith.constant 0 : index
    %c0_5 = arith.constant 0 : index
    %c0_6 = arith.constant 0 : index
    %c0_7 = arith.constant 0 : index
    %c0_8 = arith.constant 0 : index
    %2 = vector.load %arg5[%c0_4, %c0_5, %c0_6, %c0_7, %c0_8] : memref<1x2x1x2x128xf32, #tpu.memory_space<vmem>>, vector<1x2x1x2x128xf32>
    %3 = vector.shape_cast %2 : vector<1x2x1x2x128xf32> to vector<2x2x128xf32>
    %4 = vector.shape_cast %1 : vector<2x2x128xf32> to vector<1x2x1x2x128xf32>
    tpu.vector_store %arg5[%c0_4, %c0_5, %c0_6, %c0_7, %c0_8], %4 {strides = array<i32>} : memref<1x2x1x2x128xf32, #tpu.memory_space<vmem>>, vector<1x2x1x2x128xf32>,
    return
  }
  func.func @transform_0(%arg0: i32, %arg1: i32, %arg2: i32, %arg3: i32) -> (i32, i32, i32, i32, i32) {
    %c0_i32 = arith.constant 0 : i32
    %c0_i32_0 = arith.constant 0 : i32
    return %arg0, %arg1, %arg2, %arg3, %c0_i32 : i32, i32, i32, i32, i32
  }
  func.func @transform_1(%arg0: i32, %arg1: i32, %arg2: i32, %arg3: i32) -> (i32, i32, i32, i32, i32) {
    %c0_i32 = arith.constant 0 : i32
    %c0_i32_0 = arith.constant 0 : i32
    return %arg0, %arg2, %arg1, %arg3, %c0_i32 : i32, i32, i32, i32, i32
  }
}

</mosaic_0001>

<llo_original>
// kernel: tpu_custom_call.1
$region0: #{tpu_custom_call.1}
  #allocation0 [shape = 'u32[]', space=smem, size = 0x4, offset = 0x4, fixed_abs, tag = 'smem constant byte address 0x4 - core index']
  #allocation1 [shape = 'u32[144,128]{1,0:T(1,128)}', space=vmem, size = 0x12000, scoped, tag = 'internal scratch']
  %s0 = inlined_call_operand.hbm [shape: f32[2,2,2,2,128], index: 0, kind: input, shape index: {}]
  %s1 = inlined_call_operand.hbm [shape: f32[2,2,2,2,128], index: 1, kind: output, shape index: {}]
  %s2 = sld [smem:[#allocation0]]
  $region41: #{tpu_custom_call.1} parent=0
    _
  %s4 = ssub.s32 1, %s2
  %s5 = scalar_select 0, %s4, %s2
  $region1: #{tpu_custom_call.1} parent=0
    #allocation2 [shape = 'u8[4096]{0}', space=vmem, size = 0x1000, scoped, tag = 'input window, operand 0']
    #allocation3 [shape = 's32[2]{0}', space=sflag, size = 0x8, scoped, tag = 'scoped memory for tpu_custom_call.1']
    #allocation4 [shape = 's32[2]{0}', space=sflag, size = 0x8, scoped, tag = 'scoped memory for tpu_custom_call.1']
    #allocation5 [shape = 'u8[4096]{0}', space=vmem, size = 0x1000, scoped, tag = 'output window, operand 0']
    %6 = vsyncpa [#allocation3], 0
    %s7 = scalar_lea.sflag [#allocation3], 1
    %8 = vsyncpa %s7, 0
    %9 = vsyncpa [#allocation4], 0
    %s10 = scalar_lea.sflag [#allocation4], 1
    %11 = vsyncpa %s10, 0
    loop: start=0, step=1, limit=6
    $region2: #{tpu_custom_call.1} parent=1 // loop_pre_header
      _
    $region3: #{tpu_custom_call.1} parent=1 // loop_header
      %s13 = sphi 0, %s17
      %p14 = scmp.ge.s32.totalorder %s13, 6
      %s20 = sphi 0, %s46
      %s21 = sphi 0, %s42
      %s22 = sphi 0, %s38
      %s23 = sphi 0, %s34
      %s24 = sphi 0, %s20
      %s25 = sphi 0, %s21
      %s26 = sphi 0, %s22
      %s27 = sphi 0, %s23
      %s28 = sphi 0, %s24
      %s29 = sphi 0, %s25
      %s30 = sphi 0, %s26
      %s31 = sphi 0, %s27
      %s55 = sphi 0, %s57
      %s58 = sphi 0, %s55
      %s59 = sphi 0, %s58
      %s75 = sphi 0, %s59
      %s87 = sphi 0, %s89
      %s90 = sphi 0, %s87
      %s91 = sphi 0, %s90
      %s107 = sphi 0, %s91
    $region4: #{tpu_custom_call.1} parent=1 // loop_header_branch
      %16 = sbr.rel (%p14) target = $region8
    $region5: #{tpu_custom_call.1} parent=1 // loop_body
      %s18 = ssub.s32 %s13, 1
      %s19 = ssub.s32 %s13, 2
      %s32 = sadd.s32 1, %s23
      %p33 = scmp.ge.s32.totalorder %s32, 1
      %s34 = scalar_select %p33, 0, %s32
      %s35 = sadd.s32 1, %s22
      %s36 = scalar_select %p33, %s35, %s22
      %p37 = scmp.ge.s32.totalorder %s36, 1
      %s38 = scalar_select %p37, 0, %s36
      %s39 = sadd.s32 1, %s21
      %s40 = scalar_select %p37, %s39, %s21
      %p41 = scmp.ge.s32.totalorder %s40, 2
      %s42 = scalar_select %p41, 0, %s40
      %s43 = sadd.s32 1, %s20
      %s44 = scalar_select %p41, %s43, %s20
      %p45 = scmp.ge.s32.totalorder %s44, 2
      %s46 = scalar_select %p45, 0, %s44
      %s47 = ssub.s32 %s20, %s46
      %s48 = ssub.s32 %s21, %s42
      %s49 = sor.u32 %s47, %s48
      %s50 = ssub.s32 %s22, %s38
      %s51 = sor.u32 %s49, %s50
      %s52 = ssub.s32 %s23, %s34
      %s53 = sor.u32 %s51, %s52
      %p54 = scmp.eq.s32.totalorder %s53, 0
      %s56 = sadd.s32 %s55, 1
      %s57 = scalar_select %p54, %s55, %s56
      %p60 = pneg %p54
      %p61 = scmp.eq.s32.totalorder %s13, 3
      %p62 = por %p60, %p61
      %p63 = scmp.ne.s32.totalorder %s55, %s58
      %p64 = scmp.eq.s32.totalorder %s13, 0
      %p65 = por %p63, %p64
      %p66 = scmp.ne.s32.totalorder %s55, %s58
      %p67 = scmp.eq.s32.totalorder %s18, 3
      %p68 = por %p66, %p67
      %p69 = scmp.ne.s32.totalorder %s58, %s59
      %p70 = scmp.eq.s32.totalorder %s18, 0
      %p71 = por %p69, %p70
      %p72 = scmp.ne.s32.totalorder %s58, %s59
      %p73 = scmp.eq.s32.totalorder %s19, 3
      %p74 = por %p72, %p73
      %p76 = scmp.ne.s32.totalorder %s59, %s75
      %p77 = scmp.eq.s32.totalorder %s19, 0
      %p78 = por %p76, %p77
      %s79 = ssub.s32 %s20, %s46
      %s80 = ssub.s32 %s22, %s38
      %s81 = sor.u32 %s79, %s80
      %s82 = ssub.s32 %s21, %s42
      %s83 = sor.u32 %s81, %s82
      %s84 = ssub.s32 %s23, %s34
      %s85 = sor.u32 %s83, %s84
      %p86 = scmp.eq.s32.totalorder %s85, 0
      %s88 = sadd.s32 %s87, 1
      %s89 = scalar_select %p86, %s87, %s88
      %p92 = pneg %p86
      %p93 = scmp.eq.s32.totalorder %s13, 3
      %p94 = por %p92, %p93
      %p95 = scmp.ne.s32.totalorder %s87, %s90
      %p96 = scmp.eq.s32.totalorder %s13, 0
      %p97 = por %p95, %p96
      %p98 = scmp.ne.s32.totalorder %s87, %s90
      %p99 = scmp.eq.s32.totalorder %s18, 3
      %p100 = por %p98, %p99
      %p101 = scmp.ne.s32.totalorder %s90, %s91
      %p102 = scmp.eq.s32.totalorder %s18, 0
      %p103 = por %p101, %p102
      %p104 = scmp.ne.s32.totalorder %s90, %s91
      %p105 = scmp.eq.s32.totalorder %s19, 3
      %p106 = por %p104, %p105
      %p108 = scmp.ne.s32.totalorder %s91, %s107
      %p109 = scmp.eq.s32.totalorder %s19, 0
      %p110 = por %p108, %p109
      %p111 = scmp.le.s32.totalorder 1, %s13
      %p112 = scmp.lt.s32.totalorder %s13, 5
      %p113 = pnand %p111, %p112
      %p114 = pneg %p113
      // Predicated region
      $region9: #{tpu_custom_call.1} parent=5 // pred_check
        _
      $region10: #{tpu_custom_call.1} parent=5 // pred_check_branch
        %116 = sbr.rel (%p113) target = $region12
      $region11: #{tpu_custom_call.1} parent=5 // pred_region
        %s117 = ssub.s32 %s13, 1
      $region12: #{tpu_custom_call.1} parent=5 // pred_fallthru
        _
      %p118 = scmp.lt.s32.totalorder %s13, 4
      // Predicated region
      $region13: #{tpu_custom_call.1} parent=5 // pred_check
        %p119 = pneg %p118
      $region14: #{tpu_custom_call.1} parent=5 // pred_check_branch
        %121 = sbr.rel (%p119) target = $region16
      $region15: #{tpu_custom_call.1} parent=5 // pred_region
        // Predicated region
        $region17: #{tpu_custom_call.1} parent=15 // pred_check
          %p122 = pneg %p65
        $region18: #{tpu_custom_call.1} parent=15 // pred_check_branch
          %124 = sbr.rel (%p122) target = $region20
        $region19: #{tpu_custom_call.1} parent=15 // pred_region
          %s125 = sand.u32 %s55, 1
          %s126 = scalar_lea.sflag [#allocation3], %s125
          %s127 = sand.u32 %s55, 1
          %s128 = smul.addr %s127, 4
          %s129 = scalar_lea.vmem [#allocation2], %s128
          %s130 = smul.u32 2, %s22
          %s132 = ssub.s32 64, 64
          %133 = vsyncadd %s126, %s132
          %s134 = sadd.s32 %s23, %s130
          %s135 = smul.addr %s21, 2
          %s136 = sadd.s32 %s134, %s135
          %s137 = smul.addr %s20, 4
          %s138 = sadd.s32 %s136, %s137
          %s139 = smul.addr %s138, 32
          %s140 = scalar_lea.hbm %s0, %s139
          %s141 = sshll.u32 %s129, 4
          %s142 = int_to_ptr.vmem [resolvable:$true] %s141
          %147 = dma.hbm_to_vmem [thread:$0]  %s140, 64, %s142, %s126, 32, 32, 2
        $region20: #{tpu_custom_call.1} parent=15 // pred_fallthru
          _
      $region16: #{tpu_custom_call.1} parent=5 // pred_fallthru
        _
      %p148 = scmp.le.s32.totalorder 1, %s13
      %p149 = scmp.lt.s32.totalorder %s13, 5
      %p150 = pnand %p148, %p149
      %p151 = pneg %p150
      // Predicated region
      $region21: #{tpu_custom_call.1} parent=5 // pred_check
        _
      $region22: #{tpu_custom_call.1} parent=5 // pred_check_branch
        %153 = sbr.rel (%p150) target = $region24
      $region23: #{tpu_custom_call.1} parent=5 // pred_region
        %s154 = ssub.s32 %s13, 1
        %s155 = sand.u32 %s58, 1
        %s156 = scalar_lea.sflag [#allocation3], %s155
        %s157 = sand.u32 %s58, 1
        %s158 = smul.addr %s157, 4
        %s159 = scalar_lea.vmem [#allocation2], %s158
        // Predicated region
        $region25: #{tpu_custom_call.1} parent=23 // pred_check
          %p160 = pneg %p71
        $region26: #{tpu_custom_call.1} parent=23 // pred_check_branch
          %162 = sbr.rel (%p160) target = $region28
        $region27: #{tpu_custom_call.1} parent=23 // pred_region
          %163 = dma.done %s156, 64
        $region28: #{tpu_custom_call.1} parent=23 // pred_fallthru
          _
        %s164 = sand.u32 %s58, 1
        %s165 = scalar_lea.sflag [#allocation3], %s164
        %s166 = sand.u32 %s58, 1
        %s167 = smul.addr %s166, 4
        %s168 = scalar_lea.vmem [#allocation2], %s167
        %p169 = pneg %p71
        %p170 = pneg %p68
        %p171 = pneg %p103
        %p172 = pneg %p100
        %s173 = sand.u32 %s90, 1
        %s174 = scalar_lea.sflag [#allocation4], %s173
        %s175 = sand.u32 %s90, 1
        %s176 = smul.addr %s175, 4
        %s177 = scalar_lea.vmem [#allocation5], %s176
        %s178 = smul.u32 2, %s26
        %s179 = smul.u32 2, %s26
        %v180 = vld [vmem:[%s159] sm:$0x3]
        %v181 = vld [vmem:[%s159 + $0x2] sm:$0x3]
        %182 = vst [vmem:[%s177] sm:$0x3] %v180
        %183 = vst [vmem:[%s177 + $0x2] sm:$0x3] %v181
        %s184 = sand.u32 %s90, 1
        %s185 = scalar_lea.sflag [#allocation4], %s184
        %s186 = sand.u32 %s90, 1
        %s187 = smul.addr %s186, 4
        %s188 = scalar_lea.vmem [#allocation5], %s187
        // Predicated region
        $region29: #{tpu_custom_call.1} parent=23 // pred_check
          %p189 = pneg %p100
        $region30: #{tpu_custom_call.1} parent=23 // pred_check_branch
          %191 = sbr.rel (%p189) target = $region32
        $region31: #{tpu_custom_call.1} parent=23 // pred_region
          %s192 = smul.u32 2, %s26
          %s194 = ssub.s32 64, 64
          %195 = vsyncadd %s185, %s194
          %s196 = sadd.s32 %s27, %s25
          %s197 = smul.addr %s192, 2
          %s198 = sadd.s32 %s196, %s197
          %s199 = smul.addr %s24, 4
          %s200 = sadd.s32 %s198, %s199
          %s201 = smul.addr %s200, 32
          %s202 = scalar_lea.hbm %s1, %s201
          %s203 = sshll.u32 %s188, 4
          %s204 = int_to_ptr.vmem [resolvable:$true] %s203
          %209 = dma.vmem_to_hbm [thread:$0]  %s204, 64, %s202, %s185, 32, 64, 2
        $region32: #{tpu_custom_call.1} parent=23 // pred_fallthru
          _
      $region24: #{tpu_custom_call.1} parent=5 // pred_fallthru
        _
      %p210 = scmp.le.s32.totalorder 2, %s13
      // Predicated region
      $region33: #{tpu_custom_call.1} parent=5 // pred_check
        %p211 = pneg %p210
      $region34: #{tpu_custom_call.1} parent=5 // pred_check_branch
        %213 = sbr.rel (%p211) target = $region36
      $region35: #{tpu_custom_call.1} parent=5 // pred_region
        %s214 = ssub.s32 %s13, 2
        // Predicated region
        $region37: #{tpu_custom_call.1} parent=35 // pred_check
          %p215 = pneg %p106
        $region38: #{tpu_custom_call.1} parent=35 // pred_check_branch
          %217 = sbr.rel (%p215) target = $region40
        $region39: #{tpu_custom_call.1} parent=35 // pred_region
          %s218 = sand.u32 %s91, 1
          %s219 = scalar_lea.sflag [#allocation4], %s218
          %s220 = sand.u32 %s91, 1
          %s221 = smul.addr %s220, 4
          %s222 = scalar_lea.vmem [#allocation5], %s221
          %223 = dma.done %s219, 64
        $region40: #{tpu_custom_call.1} parent=35 // pred_fallthru
          _
      $region36: #{tpu_custom_call.1} parent=5 // pred_fallthru
        _
    $region6: #{tpu_custom_call.1} parent=1 // loop_footer
      %s17 = sadd.s32 1, %s13
    $region7: #{tpu_custom_call.1} parent=1 // loop_footer_branch
      %12 = sbr.rel target = $region3
    $region8: #{tpu_custom_call.1} parent=1 // loop_exit
      _
    %224 = vsyncpa [#allocation3], 1
    %s225 = scalar_lea.sflag [#allocation3], 1
    %226 = vsyncpa %s225, 1
    %227 = vsyncpa [#allocation4], 1
    %s228 = scalar_lea.sflag [#allocation4], 1
    %229 = vsyncpa %s228, 1

</llo_original>
